<compile_context>
chip_gen: v6e
topology: v6e:2x2x1
jax: 0.10.0
libtpu: 0.0.40
codegen_flags: <defaults>
</compile_context>

<pallas_src>
import functools

import jax
import jax.numpy as jnp
from jax import lax
from jax.experimental import pallas as pl
from jax.experimental.pallas import tpu as pltpu

LANE = 128


def _round_up(n, m):
    return ((n + m - 1) // m) * m


def gcn_batched_kernel(a_ref, xw1_ref, b1_ref, w2_ref, b2_ref, out_ref,
                       *, num_classes):
    """One grid step = one full 2-layer GCN forward for adjacency A_hat[k].

    a_ref:   [N, N]   bf16  (per-step block of the [K, N, N] batch)
    xw1_ref: [N, Hp]  bf16  X @ W1, precomputed once, resident across the grid
    w2_ref:  [Hp, Cp] bf16  resident;  b*_ref: f32 lane-padded biases, resident
    out_ref: [N, Cp]  f32 log-probs (padded class lanes hold junk, sliced off
             outside the kernel).
    """
    a = a_ref[...]

    # layer 1: A_hat @ (X W1) + b1, ReLU   (bf16 MXU matmul, f32 accumulate)
    h = jnp.dot(a, xw1_ref[...],
                preferred_element_type=jnp.float32) + b1_ref[...]
    h = jnp.maximum(h, 0.0).astype(jnp.bfloat16)

    # layer 2: A_hat @ (H @ W2) + b2   (Cp <= Hp after padding -> this order
    # keeps the N^2-sized matmul on the narrower class dimension)
    hw = jnp.dot(h, w2_ref[...], preferred_element_type=jnp.float32)
    z = jnp.dot(a, hw.astype(jnp.bfloat16),
                preferred_element_type=jnp.float32) + b2_ref[...]

    # exclude zero-padded class lanes from the softmax, then log_softmax (f32)
    if num_classes != z.shape[-1]:
        lane = lax.broadcasted_iota(jnp.int32, z.shape, 1)
        z = jnp.where(lane < num_classes, z, jnp.float32(-1e30))
    m = jnp.max(z, axis=-1, keepdims=True)
    e = jnp.exp(z - m)
    lse = jnp.log(jnp.sum(e, axis=-1, keepdims=True)) + m
    out_ref[...] = z - lse


def build_norm_adj(edge_index, num_nodes):
    """Dense symmetric-normalized adjacency D^-1/2 (A + I) D^-1/2.

    Built ONCE per graph and reused across explainer forwards (hoisted out of
    the per-call path).
    # TODO(synk): the data-dependent scatter from edge_index stays in plain
    # JAX; it has no clean Pallas equivalent at this scale.
    """
    src, dst = edge_index[0], edge_index[1]
    a = jnp.zeros((num_nodes, num_nodes), jnp.float32).at[dst, src].set(1.0)
    a = a + jnp.eye(num_nodes, dtype=jnp.float32)
    deg = jnp.sum(a, axis=1)
    dinv = jnp.where(deg > 0, 1.0 / jnp.sqrt(deg), 0.0)
    return a * dinv[:, None] * dinv[None, :]


@jax.jit
def gcn_forward_batched(a_hat_batch, x, params):
    """K GCN forwards (one per adjacency in a_hat_batch [K,N,N]) in ONE call."""
    K, N, _ = a_hat_batch.shape
    w1, b1, w2, b2 = params
    H, C = w1.shape[1], w2.shape[1]
    Hp, Cp = _round_up(H, LANE), _round_up(C, LANE)

    # A_hat-independent first-layer matmul hoisted out of the K grid: one f32
    # matmul per call instead of one bf16 matmul per perturbed adjacency.
    xw1 = x.astype(jnp.float32) @ w1.astype(jnp.float32)          # [N, H] f32
    xw1_p = jnp.pad(xw1, ((0, 0), (0, Hp - H))).astype(jnp.bfloat16)

    # zero-pad to 128-lane-dense shapes (exact: padded rows/cols contribute 0);
    # MXU operands cast to bf16, biases stay f32.
    a_b = a_hat_batch.astype(jnp.bfloat16)
    b1_p = jnp.pad(b1, ((0, 0), (0, Hp - H))).astype(jnp.float32)
    w2_p = jnp.pad(w2, ((0, Hp - H), (0, Cp - C))).astype(jnp.bfloat16)
    b2_p = jnp.pad(b2, ((0, 0), (0, Cp - C))).astype(jnp.float32)

    # explicit scoped-VMEM budget: double-buffered per-step blocks + residents
    # (keeps v5e's 16 MiB default from OOMing at moderate N; capped at 64 MiB
    # which is v7x physical).
    per_step = N * N * 2 + N * Cp * 4
    resident = (N * Hp + Hp * Cp) * 2 + (Hp + Cp) * 4
    vmem_limit = int(min(max(2 * per_step + resident + (2 << 20),
                             32 * 1024 * 1024), 64 * 1024 * 1024))
    # TODO(synk): for Cora-scale N, row-tile A_hat (grid over N//TM) and split
    # the two layers into separate pallas_calls instead of one full-block A_hat.

    kernel = functools.partial(gcn_batched_kernel, num_classes=C)
    out_p = pl.pallas_call(
        kernel,
        out_shape=jax.ShapeDtypeStruct((K, N, Cp), jnp.float32),
        grid=(K,),
        in_specs=[
            pl.BlockSpec((None, N, N), lambda k: (k, 0, 0)),  # A_hat[k] per step
            pl.BlockSpec((N, Hp), lambda k: (0, 0)),          # resident XW1
            pl.BlockSpec((1, Hp), lambda k: (0, 0)),          # resident b1
            pl.BlockSpec((Hp, Cp), lambda k: (0, 0)),         # resident W2
            pl.BlockSpec((1, Cp), lambda k: (0, 0)),          # resident b2
        ],
        out_specs=pl.BlockSpec((None, N, Cp), lambda k: (k, 0, 0)),
        compiler_params=pltpu.CompilerParams(
            dimension_semantics=("parallel",),  # independent forwards; lets
                                                # v7x split K across its 2 TCs
            vmem_limit_bytes=vmem_limit,
        ),
    )(a_b, xw1_p, b1_p, w2_p, b2_p)
    return out_p[:, :, :C]


def gcn_forward(x, edge_index, params, batch=None):
    """Single forward: what the wrapped model does with one `data` object."""
    del batch  # node-classification GCN ignores data.batch
    a_hat = build_norm_adj(edge_index, x.shape[0])
    return gcn_forward_batched(a_hat[None], x, params)[0]


def model_wrapper_forward(x, edge_index, params, batch=None):
    """Mirrors ModelWrapper.forward: pack (x, edge_index, batch), call model."""
    data = {"x": x, "edge_index": edge_index, "batch": batch}
    return gcn_forward(data["x"], data["edge_index"], params, data["batch"])


def gcn_reference(a_hat, x, params):
    w1, b1, w2, b2 = params
    h = jnp.maximum(a_hat @ (x @ w1) + b1, 0.0)
    z = a_hat @ (h @ w2) + b2
    return jax.nn.log_softmax(z, axis=-1)


def init_params(key, in_feats, hidden, num_classes):
    k1, k2 = jax.random.split(key)
    s1 = (6.0 / (in_feats + hidden)) ** 0.5
    s2 = (6.0 / (hidden + num_classes)) ** 0.5
    w1 = jax.random.uniform(k1, (in_feats, hidden), jnp.float32, -s1, s1)
    b1 = jnp.zeros((1, hidden), jnp.float32)
    w2 = jax.random.uniform(k2, (hidden, num_classes), jnp.float32, -s2, s2)
    b2 = jnp.zeros((1, num_classes), jnp.float32)
    return (w1, b1, w2, b2)


if __name__ == "__main__":
    N, F_IN, HID, C, K = 16, 8, 32, 4, 4

    key = jax.random.PRNGKey(0)
    kx, kp, km = jax.random.split(key, 3)
    x = jax.random.normal(kx, (N, F_IN), jnp.float32)

    # deterministic ring graph (both directions), edge_index [2, E]
    idx = jnp.arange(N, dtype=jnp.int32)
    src = jnp.concatenate([idx, (idx + 1) % N])
    dst = jnp.concatenate([(idx + 1) % N, idx])
    edge_index = jnp.stack([src, dst], axis=0)              # [2, 2N]

    params = init_params(kp, F_IN, HID, C)

    # --- single forward, mirroring ModelWrapper.forward(x, edge_index, batch)
    out_single = model_wrapper_forward(x, edge_index, params, batch=None)
    out_single = jax.block_until_ready(out_single)
    assert out_single.shape == (N, C)

    # --- explainer-style usage: K perturbed adjacencies, ONE pallas_call.
    a_hat = build_norm_adj(edge_index, N)                   # built once, cached
    mask = jax.random.uniform(km, (K, N, N), jnp.float32, 0.5, 1.0)
    mask = 0.5 * (mask + jnp.swapaxes(mask, 1, 2))          # symmetric edge masks
    a_batch = (a_hat[None, :, :] * mask).at[0].set(a_hat)   # entry 0 unperturbed
    out_batch = jax.block_until_ready(gcn_forward_batched(a_batch, x, params))
    assert out_batch.shape == (K, N, C)

    # checks: rows are valid log-probs; batch entry 0 matches the f32 reference
    # (bf16-matmul tolerance) and the single-call path.
    probs = jnp.exp(out_batch)
    assert bool(jnp.all(jnp.abs(jnp.sum(probs, axis=-1) - 1.0) < 1e-4))
    ref0 = gcn_reference(a_hat, x, params)
    assert bool(jnp.max(jnp.abs(out_batch[0] - ref0)) < 0.1)
    assert bool(jnp.max(jnp.abs(out_single - out_batch[0])) < 1e-5)
    print("KERNEL_OK")
</pallas_src>

<mosaic_0001>
module attributes {stable_mosaic.version = 11 : i64} {
  func.func @gcn_batched_kernel(%arg0: i32, %arg1: memref<1x16x16xbf16, #tpu.memory_space<vmem>>, %arg2: memref<16x128xbf16, #tpu.memory_space<vmem>>, %arg3: memref<1x128xf32, #tpu.memory_space<vmem>>, %arg4: memref<128x128xbf16, #tpu.memory_space<vmem>>, %arg5: memref<1x128xf32, #tpu.memory_space<vmem>>, %arg6: memref<1x16x128xf32, #tpu.memory_space<vmem>>) attributes {dimension_semantics = [#tpu.dimension_semantics<parallel>], iteration_bounds = array<i64: 1>, scalar_prefetch = 0 : i64, scratch_operands = 0 : i64, tpu.core_type = #tpu.core_type<tc>, window_params = [{transform_indices = @transform_0, window_bounds = array<i64: 1, 16, 16>}, {pipeline_mode = #tpu.pipeline_mode<synchronous>, transform_indices = @transform_1, window_bounds = array<i64: 16, 128>}, {pipeline_mode = #tpu.pipeline_mode<synchronous>, transform_indices = @transform_2, window_bounds = array<i64: 1, 128>}, {pipeline_mode = #tpu.pipeline_mode<synchronous>, transform_indices = @transform_3, window_bounds = array<i64: 128, 128>}, {pipeline_mode = #tpu.pipeline_mode<synchronous>, transform_indices = @transform_4, window_bounds = array<i64: 1, 128>}, {transform_indices = @transform_5, window_bounds = array<i64: 1, 16, 128>}]} {
    %c0 = arith.constant 0 : index
    %c0_0 = arith.constant 0 : index
    %c0_1 = arith.constant 0 : index
    %0 = vector.load %arg1[%c0, %c0_0, %c0_1] : memref<1x16x16xbf16, #tpu.memory_space<vmem>>, vector<1x16x16xbf16>
    %1 = vector.shape_cast %0 : vector<1x16x16xbf16> to vector<16x16xbf16>
    %c0_2 = arith.constant 0 : index
    %c0_3 = arith.constant 0 : index
    %2 = vector.load %arg2[%c0_2, %c0_3] : memref<16x128xbf16, #tpu.memory_space<vmem>>, vector<16x128xbf16>
    %cst = arith.constant dense<0.000000e+00> : vector<16x128xf32>
    %3 = tpu.matmul %1, %2, %cst {dimension_numbers = #tpu.dot_dimension_numbers<[1], [0], [0], [1], [0, 0, 1, 1], [], []>} : vector<16x16xbf16>, vector<16x128xbf16>, vector<16x128xf32> -> vector<16x128xf32>
    %c0_4 = arith.constant 0 : index
    %c0_5 = arith.constant 0 : index
    %4 = vector.load %arg3[%c0_4, %c0_5] : memref<1x128xf32, #tpu.memory_space<vmem>>, vector<1x128xf32>
    %5 = vector.broadcast %4 : vector<1x128xf32> to vector<16x128xf32>
    %6 = arith.addf %3, %5 : vector<16x128xf32>
    %cst_6 = arith.constant 0.000000e+00 : f32
    %7 = vector.broadcast %cst_6 : f32 to vector<16x128xf32>
    %8 = arith.maximumf %6, %7 : vector<16x128xf32>
    %9 = arith.truncf %8 : vector<16x128xf32> to vector<16x128xbf16>
    %c0_7 = arith.constant 0 : index
    %c0_8 = arith.constant 0 : index
    %10 = vector.load %arg4[%c0_7, %c0_8] : memref<128x128xbf16, #tpu.memory_space<vmem>>, vector<128x128xbf16>
    %cst_9 = arith.constant dense<0.000000e+00> : vector<16x128xf32>
    %11 = tpu.matmul %9, %10, %cst_9 {dimension_numbers = #tpu.dot_dimension_numbers<[1], [0], [0], [1], [0, 0, 1, 1], [], []>} : vector<16x128xbf16>, vector<128x128xbf16>, vector<16x128xf32> -> vector<16x128xf32>
    %12 = arith.truncf %11 : vector<16x128xf32> to vector<16x128xbf16>
    %cst_10 = arith.constant dense<0.000000e+00> : vector<16x128xf32>
    %13 = tpu.matmul %1, %12, %cst_10 {dimension_numbers = #tpu.dot_dimension_numbers<[1], [0], [0], [1], [0, 0, 1, 1], [], []>} : vector<16x16xbf16>, vector<16x128xbf16>, vector<16x128xf32> -> vector<16x128xf32>
    %c0_11 = arith.constant 0 : index
    %c0_12 = arith.constant 0 : index
    %14 = vector.load %arg5[%c0_11, %c0_12] : memref<1x128xf32, #tpu.memory_space<vmem>>, vector<1x128xf32>
    %15 = vector.broadcast %14 : vector<1x128xf32> to vector<16x128xf32>
    %16 = arith.addf %13, %15 : vector<16x128xf32>
    %17 = tpu.iota {dimensions = array<i32: 1>} : vector<16x128xi32>
    %c4_i32 = arith.constant 4 : i32
    %18 = vector.broadcast %c4_i32 : i32 to vector<16x128xi32>
    %19 = arith.cmpi slt, %17, %18 : vector<16x128xi32>
    %cst_13 = arith.constant -1.000000e+30 : f32
    %20 = vector.broadcast %cst_13 : f32 to vector<16x128xf32>
    %21 = arith.select %19, %16, %20 : vector<16x128xi1>, vector<16x128xf32>
    %cst_14 = arith.constant dense<0xFF800000> : vector<16xf32>
    %22 = vector.multi_reduction <maximumf>, %21, %cst_14 [1] : vector<16x128xf32> to vector<16xf32>
    %23 = vector.shape_cast %22 : vector<16xf32> to vector<16x1xf32>
    %24 = vector.broadcast %23 : vector<16x1xf32> to vector<16x128xf32>
    %25 = arith.subf %21, %24 : vector<16x128xf32>
    %26 = math.exp %25 : vector<16x128xf32>
    %cst_15 = arith.constant dense<0.000000e+00> : vector<16xf32>
    %27 = vector.multi_reduction <add>, %26, %cst_15 [1] : vector<16x128xf32> to vector<16xf32>
    %28 = vector.shape_cast %27 : vector<16xf32> to vector<16x1xf32>
    %29 = math.log %28 : vector<16x1xf32>
    %30 = arith.addf %29, %23 : vector<16x1xf32>
    %31 = vector.broadcast %30 : vector<16x1xf32> to vector<16x128xf32>
    %32 = arith.subf %21, %31 : vector<16x128xf32>
    %c0_16 = arith.constant 0 : index
    %c0_17 = arith.constant 0 : index
    %c0_18 = arith.constant 0 : index
    %33 = vector.load %arg6[%c0_16, %c0_17, %c0_18] : memref<1x16x128xf32, #tpu.memory_space<vmem>>, vector<1x16x128xf32>
    %34 = vector.shape_cast %33 : vector<1x16x128xf32> to vector<16x128xf32>
    %35 = vector.shape_cast %32 : vector<16x128xf32> to vector<1x16x128xf32>
    tpu.vector_store %arg6[%c0_16, %c0_17, %c0_18], %35 {strides = array<i32>} : memref<1x16x128xf32, #tpu.memory_space<vmem>>, vector<1x16x128xf32>,
    return
  }
  func.func @transform_0(%arg0: i32) -> (i32, i32, i32) {
    %c0_i32 = arith.constant 0 : i32
    %c0_i32_0 = arith.constant 0 : i32
    %c0_i32_1 = arith.constant 0 : i32
    return %arg0, %c0_i32, %c0_i32_0 : i32, i32, i32
  }
  func.func @transform_1(%arg0: i32) -> (i32, i32) {
    %c0_i32 = arith.constant 0 : i32
    %c0_i32_0 = arith.constant 0 : i32
    %c0_i32_1 = arith.constant 0 : i32
    return %c0_i32, %c0_i32_0 : i32, i32
  }
  func.func @transform_2(%arg0: i32) -> (i32, i32) {
    %c0_i32 = arith.constant 0 : i32
    %c0_i32_0 = arith.constant 0 : i32
    %c0_i32_1 = arith.constant 0 : i32
    return %c0_i32, %c0_i32_0 : i32, i32
  }
  func.func @transform_3(%arg0: i32) -> (i32, i32) {
    %c0_i32 = arith.constant 0 : i32
    %c0_i32_0 = arith.constant 0 : i32
    %c0_i32_1 = arith.constant 0 : i32
    return %c0_i32, %c0_i32_0 : i32, i32
  }
  func.func @transform_4(%arg0: i32) -> (i32, i32) {
    %c0_i32 = arith.constant 0 : i32
    %c0_i32_0 = arith.constant 0 : i32
    %c0_i32_1 = arith.constant 0 : i32
    return %c0_i32, %c0_i32_0 : i32, i32
  }
  func.func @transform_5(%arg0: i32) -> (i32, i32, i32) {
    %c0_i32 = arith.constant 0 : i32
    %c0_i32_0 = arith.constant 0 : i32
    %c0_i32_1 = arith.constant 0 : i32
    return %arg0, %c0_i32, %c0_i32_0 : i32, i32, i32
  }
}

</mosaic_0001>

<llo_original>
// kernel: gcn_forward_batched.1
$region0: #{gcn_forward_batched.1}
  #allocation0 [shape = 'u32[]', space=smem, size = 0x4, offset = 0x4, fixed_abs, tag = 'smem constant byte address 0x4 - core index']
  #allocation1 [shape = 'u32[144,128]{1,0:T(1,128)}', space=vmem, size = 0x12000, scoped, tag = 'internal scratch']
  %s0 = inlined_call_operand.vmem [shape: bf16[1,16,16], index: 0, kind: input, shape index: {}]
  %s1 = inlined_call_operand.vmem [shape: bf16[16,128], index: 1, kind: input, shape index: {}]
  %s2 = inlined_call_operand.vmem [shape: f32[1,128], index: 2, kind: input, shape index: {}]
  %s3 = inlined_call_operand.vmem [shape: bf16[128,128], index: 3, kind: input, shape index: {}]
  %s4 = inlined_call_operand.vmem [shape: f32[1,128], index: 4, kind: input, shape index: {}]
  %s5 = inlined_call_operand.vmem [shape: f32[1,16,128], index: 5, kind: output, shape index: {}]
  %s6 = sld [smem:[#allocation0]]
  $region30: #{gcn_forward_batched.1} parent=0
    _
  %s8 = ssub.s32 1, %s6
  %s9 = scalar_select 0, %s8, %s6
  // Predicated region
  $region2: #{gcn_forward_batched.1} parent=0 // pred_check
    _
  $region3: #{gcn_forward_batched.1} parent=0 // pred_check_branch
    %11 = sbr.rel (0) target = $region5
  $region4: #{gcn_forward_batched.1} parent=0 // pred_region
    _
  $region5: #{gcn_forward_batched.1} parent=0 // pred_fallthru
    _
  // Predicated region
  $region6: #{gcn_forward_batched.1} parent=0 // pred_check
    _
  $region7: #{gcn_forward_batched.1} parent=0 // pred_check_branch
    %13 = sbr.rel (0) target = $region9
  $region8: #{gcn_forward_batched.1} parent=0 // pred_region
    _
  $region9: #{gcn_forward_batched.1} parent=0 // pred_fallthru
    _
  // Predicated region
  $region10: #{gcn_forward_batched.1} parent=0 // pred_check
    _
  $region11: #{gcn_forward_batched.1} parent=0 // pred_check_branch
    %15 = sbr.rel (0) target = $region13
  $region12: #{gcn_forward_batched.1} parent=0 // pred_region
    _
  $region13: #{gcn_forward_batched.1} parent=0 // pred_fallthru
    _
  // Predicated region
  $region14: #{gcn_forward_batched.1} parent=0 // pred_check
    _
  $region15: #{gcn_forward_batched.1} parent=0 // pred_check_branch
    %17 = sbr.rel (0) target = $region17
  $region16: #{gcn_forward_batched.1} parent=0 // pred_region
    _
  $region17: #{gcn_forward_batched.1} parent=0 // pred_fallthru
    _
  // Predicated region
  $region18: #{gcn_forward_batched.1} parent=0 // pred_check
    _
  $region19: #{gcn_forward_batched.1} parent=0 // pred_check_branch
    %19 = sbr.rel (0) target = $region21
  $region20: #{gcn_forward_batched.1} parent=0 // pred_region
    _
  $region21: #{gcn_forward_batched.1} parent=0 // pred_fallthru
    _
  %v21 = vld [vmem:[%s0] sm:$0xf]
  %v22 = vld [vmem:[%s0 + $0x4] sm:$0xf]
  %v23 = vld [vmem:[%s1] sm:$0xf]
  %v24 = vld [vmem:[%s1 + $0x4] sm:$0xf]
  %v25 = vld [vmem:[%s2] sm:$0x1]
  %v27 = vlaneseq
  %v28 = vshrl.u32 %v27, 7
  %v29 = vsub.s32 0, %v28
  %v30 = vrot.slane %v25, %v29
  %v34 = vunpack.c.l.b16 %v21
  %v35 = vunpack.c.l.b16 %v22
  %v36 = vpack.c.b16 %v35, %v34
  %v39 = vunpack.c.l.b16 %v23
  %v40 = vunpack.c.l.b16 %v24
  %v41 = vpack.c.b16 %v40, %v39
  %vm43 = vcmask 130048
  %v45 = vsel %vm43, %v36, 0
  %47 = vmatprep.subr.bf16.mxu0 0
  %48 = vmatpush1.bf16.msra.mxu0 0
  %49 = vmatprep.subr.bf16.mxu0 0
  %50 = vmatpush1.bf16.msra.mxu0 0
  %51 = vmatprep.subr.bf16.mxu0 0
  %52 = vmatpush1.bf16.msra.mxu0 0
  %53 = vmatprep.subr.bf16.mxu0 0
  %54 = vmatpush1.bf16.msra.mxu0 0
  %55 = vmatprep.subr.bf16.mxu0 0
  %56 = vmatpush1.bf16.msra.mxu0 0
  %57 = vmatprep.subr.bf16.mxu0 0
  %58 = vmatpush1.bf16.msra.mxu0 0
  %59 = vmatprep.subr.bf16.mxu0 0
  %60 = vmatpush1.bf16.msra.mxu0 0
  %61 = vmatprep.subr.bf16.mxu0 0
  %62 = vmatpush1.bf16.msra.mxu0 %v41
  %63 = vmatprep.subr.bf16.mxu0 0
  %64 = vmatpush2.bf16.msra.mxu0 0
  %65 = vmatprep.subr.bf16.mxu0 0
  %66 = vmatpush2.bf16.msra.mxu0 0
  %67 = vmatprep.subr.bf16.mxu0 0
  %68 = vmatpush2.bf16.msra.mxu0 0
  %69 = vmatprep.subr.bf16.mxu0 0
  %70 = vmatpush2.bf16.msra.mxu0 0
  %71 = vmatprep.subr.bf16.mxu0 0
  %72 = vmatpush2.bf16.msra.mxu0 0
  %73 = vmatprep.subr.bf16.mxu0 0
  %74 = vmatpush2.bf16.msra.mxu0 0
  %75 = vmatprep.subr.bf16.mxu0 0
  %76 = vmatpush2.bf16.msra.mxu0 0
  %77 = vmatprep.subr.bf16.mxu0 0
  %78 = vmatpush2.bf16.msra.mxu0 0
  %79 = vmatprep.mubr.bf16.mxu0 0
  %80 = vmatmul.mubr.bf16.gmra.mxu0 %v45
  %v81 = vpop.f32.mrf.mxu0
  %v82 = vadd.f32 %v30, %v81
  %v83 = vpop.f32.mrf.mxu0
  %v84 = vpop.f32.mrf.mxu0
  %v85 = vadd.f32 %v30, %v84
  %v86 = vpop.f32.mrf.mxu0
  %87 = vdwg.mxu0
  %v88 = vmax.f32 %v82, 0.0
  %v89 = vmax.f32 %v85, 0.0
  %v90 = vpack.c.bf16 %v89, %v88
  %v91 = vld [vmem:[%s3] sm:$0xf]
  %v92 = vld [vmem:[%s3 + $0x4] sm:$0xf]
  %v93 = vld [vmem:[%s3 + $0x8] sm:$0xf]
  %v94 = vld [vmem:[%s3 + $0xc] sm:$0xf]
  %v95 = vld [vmem:[%s3 + $0x10] sm:$0xf]
  %v96 = vld [vmem:[%s3 + $0x14] sm:$0xf]
  %v97 = vld [vmem:[%s3 + $0x18] sm:$0xf]
  %v98 = vld [vmem:[%s3 + $0x1c] sm:$0xf]
  %v99 = vld [vmem:[%s3 + $0x20] sm:$0xf]
  %v100 = vld [vmem:[%s3 + $0x24] sm:$0xf]
  %v101 = vld [vmem:[%s3 + $0x28] sm:$0xf]
  %v102 = vld [vmem:[%s3 + $0x2c] sm:$0xf]
  %v103 = vld [vmem:[%s3 + $0x30] sm:$0xf]
  %v104 = vld [vmem:[%s3 + $0x34] sm:$0xf]
  %v105 = vld [vmem:[%s3 + $0x38] sm:$0xf]
  %v106 = vld [vmem:[%s3 + $0x3c] sm:$0xf]
  %v123 = vunpack.c.l.b16 %v91
  %v124 = vunpack.c.l.b16 %v92
  %v125 = vunpack.c.l.b16 %v93
  %v126 = vunpack.c.l.b16 %v94
  %v127 = vunpack.c.l.b16 %v95
  %v128 = vunpack.c.l.b16 %v96
  %v129 = vunpack.c.l.b16 %v97
  %v130 = vunpack.c.l.b16 %v98
  %v131 = vunpack.c.l.b16 %v99
  %v132 = vunpack.c.l.b16 %v100
  %v133 = vunpack.c.l.b16 %v101
  %v134 = vunpack.c.l.b16 %v102
  %v135 = vunpack.c.l.b16 %v103
  %v136 = vunpack.c.l.b16 %v104
  %v137 = vunpack.c.l.b16 %v105
  %v138 = vunpack.c.l.b16 %v106
  %v139 = vpack.c.b16 %v124, %v123
  %v140 = vpack.c.b16 %v126, %v125
  %v141 = vpack.c.b16 %v128, %v127
  %v142 = vpack.c.b16 %v130, %v129
  %v143 = vpack.c.b16 %v132, %v131
  %v144 = vpack.c.b16 %v134, %v133
  %v145 = vpack.c.b16 %v136, %v135
  %v146 = vpack.c.b16 %v138, %v137
  %155 = vmatprep.subr.bf16.mxu0 0
  %156 = vmatpush1.bf16.msra.mxu0 %v146
  %157 = vmatprep.subr.bf16.mxu0 0
  %158 = vmatpush1.bf16.msra.mxu0 %v145
  %159 = vmatprep.subr.bf16.mxu0 0
  %160 = vmatpush1.bf16.msra.mxu0 %v144
  %161 = vmatprep.subr.bf16.mxu0 0
  %162 = vmatpush1.bf16.msra.mxu0 %v143
  %163 = vmatprep.subr.bf16.mxu0 0
  %164 = vmatpush1.bf16.msra.mxu0 %v142
  %165 = vmatprep.subr.bf16.mxu0 0
  %166 = vmatpush1.bf16.msra.mxu0 %v141
  %167 = vmatprep.subr.bf16.mxu0 0
  %168 = vmatpush1.bf16.msra.mxu0 %v140
  %169 = vmatprep.subr.bf16.mxu0 0
  %170 = vmatpush1.bf16.msra.mxu0 %v139
  %171 = vmatprep.subr.bf16.mxu0 0
  %172 = vmatpush2.bf16.msra.mxu0 0
  %173 = vmatprep.subr.bf16.mxu0 0
  %174 = vmatpush2.bf16.msra.mxu0 0
  %175 = vmatprep.subr.bf16.mxu0 0
  %176 = vmatpush2.bf16.msra.mxu0 0
  %177 = vmatprep.subr.bf16.mxu0 0
  %178 = vmatpush2.bf16.msra.mxu0 0
  %179 = vmatprep.subr.bf16.mxu0 0
  %180 = vmatpush2.bf16.msra.mxu0 0
  %181 = vmatprep.subr.bf16.mxu0 0
  %182 = vmatpush2.bf16.msra.mxu0 0
  %183 = vmatprep.subr.bf16.mxu0 0
  %184 = vmatpush2.bf16.msra.mxu0 0
  %185 = vmatprep.subr.bf16.mxu0 0
  %186 = vmatpush2.bf16.msra.mxu0 0
  %187 = vmatprep.mubr.bf16.mxu0 0
  %188 = vmatmul.mubr.bf16.gmra.mxu0 %v90
  %v189 = vpop.f32.mrf.mxu0
  %v190 = vadd.f32 0.0, %v189
  %v191 = vpop.f32.mrf.mxu0
  %v192 = vpop.f32.mrf.mxu0
  %v193 = vadd.f32 0.0, %v192
  %v194 = vpop.f32.mrf.mxu0
  %195 = vdwg.mxu0
  %v196 = vpack.c.bf16 %v193, %v190
  %v197 = vld [vmem:[%s4] sm:$0x1]
  %v199 = vlaneseq
  %v200 = vshrl.u32 %v199, 7
  %v201 = vsub.s32 0, %v200
  %v202 = vrot.slane %v197, %v201
  %204 = vmatprep.subr.bf16.mxu0 0
  %205 = vmatpush1.bf16.msra.mxu0 0
  %206 = vmatprep.subr.bf16.mxu0 0
  %207 = vmatpush1.bf16.msra.mxu0 0
  %208 = vmatprep.subr.bf16.mxu0 0
  %209 = vmatpush1.bf16.msra.mxu0 0
  %210 = vmatprep.subr.bf16.mxu0 0
  %211 = vmatpush1.bf16.msra.mxu0 0
  %212 = vmatprep.subr.bf16.mxu0 0
  %213 = vmatpush1.bf16.msra.mxu0 0
  %214 = vmatprep.subr.bf16.mxu0 0
  %215 = vmatpush1.bf16.msra.mxu0 0
  %216 = vmatprep.subr.bf16.mxu0 0
  %217 = vmatpush1.bf16.msra.mxu0 0
  %218 = vmatprep.subr.bf16.mxu0 0
  %219 = vmatpush1.bf16.msra.mxu0 %v196
  %220 = vmatprep.subr.bf16.mxu0 0
  %221 = vmatpush2.bf16.msra.mxu0 0
  %222 = vmatprep.subr.bf16.mxu0 0
  %223 = vmatpush2.bf16.msra.mxu0 0
  %224 = vmatprep.subr.bf16.mxu0 0
  %225 = vmatpush2.bf16.msra.mxu0 0
  %226 = vmatprep.subr.bf16.mxu0 0
  %227 = vmatpush2.bf16.msra.mxu0 0
  %228 = vmatprep.subr.bf16.mxu0 0
  %229 = vmatpush2.bf16.msra.mxu0 0
  %230 = vmatprep.subr.bf16.mxu0 0
  %231 = vmatpush2.bf16.msra.mxu0 0
  %232 = vmatprep.subr.bf16.mxu0 0
  %233 = vmatpush2.bf16.msra.mxu0 0
  %234 = vmatprep.subr.bf16.mxu0 0
  %235 = vmatpush2.bf16.msra.mxu0 0
  %236 = vmatprep.mubr.bf16.mxu0 0
  %237 = vmatmul.mubr.bf16.gmra.mxu0 %v45
  %v238 = vpop.f32.mrf.mxu0
  %v239 = vadd.f32 %v202, %v238
  %v240 = vpop.f32.mrf.mxu0
  %v241 = vpop.f32.mrf.mxu0
  %v242 = vadd.f32 %v202, %v241
  %v243 = vpop.f32.mrf.mxu0
  %244 = vdwg.mxu0
  %v245 = vlaneseq
  %v246 = vand.u32 %v245, 127
  %vm247 = vcmp.lt.s32.totalorder %v246, 4
  %v248 = vsel %vm247, %v239, -1e+30
  %v249 = vsel %vm247, %v242, -1e+30
  %250 = vmax.xlane.f32.xlu0 %v248
  %v251 = vpop.xlane.xlu0 %250
  %252 = vmax.xlane.f32.xlu0 %v249
  %v253 = vpop.xlane.xlu0 %252
  %v254 = vsub.f32 %v248, %v251
  %v255 = vsub.f32 %v249, %v253
  %v256 = vmul.f32 %v254, 1.442695
  %v257 = vpow.pop %v256
  %v258 = vmul.f32 %v255, 1.442695
  %v259 = vpow.pop %v258
  %260 = vadd.xlane.f32.xlu0 %v257
  %v261 = vpop.xlane.xlu0 %260
  %262 = vadd.xlane.f32.xlu0 %v259
  %v263 = vpop.xlane.xlu0 %262
  %v264 = vlog2.pop %v261
  %v265 = vmul.f32 %v264, 0.6931472
  %v266 = vlog2.pop %v263
  %v267 = vmul.f32 %v266, 0.6931472
  %v268 = vadd.f32 %v265, %v251
  %v269 = vadd.f32 %v267, %v253
  %v270 = vsub.f32 %v248, %v268
  %v271 = vsub.f32 %v249, %v269
  %272 = vst [vmem:[%s5] sm:$0xff] %v270
  %273 = vst [vmem:[%s5 + $0x8] sm:$0xff] %v271
  // Predicated region
  $region22: #{gcn_forward_batched.1} parent=0 // pred_check
    _
  $region23: #{gcn_forward_batched.1} parent=0 // pred_check_branch
    %275 = sbr.rel (0) target = $region25
  $region24: #{gcn_forward_batched.1} parent=0 // pred_region
    _
  $region25: #{gcn_forward_batched.1} parent=0 // pred_fallthru
    _
  // Predicated region
  $region26: #{gcn_forward_batched.1} parent=0 // pred_check
    _
  $region27: #{gcn_forward_batched.1} parent=0 // pred_check_branch
    %277 = sbr.rel (0) target = $region29
  $region28: #{gcn_forward_batched.1} parent=0 // pred_region
    _
  $region29: #{gcn_forward_batched.1} parent=0 // pred_fallthru
    _

</llo_original>
